<compile_context>
chip_gen: v6e
topology: v6e:2x2x1
jax: 0.10.0
libtpu: 0.0.40
codegen_flags: <defaults>
</compile_context>

<pallas_src>
import functools

import jax
import jax.numpy as jnp
from jax.experimental import pallas as pl
from jax.experimental.pallas import tpu as pltpu

LOG_SIG_MAX = 2.0
LOG_SIG_MIN = -20.0
LANE = 128


def _round_up(n, m):
    return (n + m - 1) // m * m


def _cdiv(a, b):
    return -(-a // b)


def _pick_batch_tiling(B, tile_b_max):
    """Balanced batch tiles, >=2 grid steps when B is big enough (v7x megacore)."""
    B8 = _round_up(B, 8)
    n = max(1, _cdiv(B, tile_b_max))
    if B8 >= 16:
        n = max(n, 2)           # both v7x TensorCores get a tile
    tile_b = _round_up(_cdiv(B, n), 8)
    b_pad = n * tile_b
    return tile_b, b_pad, n


# ---------------------------------------------------------------------------
# Kernel
# ---------------------------------------------------------------------------
def actor_kernel(x_ref, w1_ref, b1_ref, w2_ref, b2_ref, wh_ref, bh_ref,
                 lo_ref, hi_ref, out_ref, *, mm_dtype):
    # fc1 (normalization already folded into w1/b1) + ReLU.  MXU operands are
    # mm_dtype (f32 or bf16); accumulation and elementwise math stay f32.
    h = jnp.dot(x_ref[...], w1_ref[...],
                preferred_element_type=jnp.float32) + b1_ref[...]
    h = jnp.maximum(h, 0.0)

    # fc2 + ReLU
    h = jnp.dot(h.astype(mm_dtype), w2_ref[...],
                preferred_element_type=jnp.float32) + b2_ref[...]
    h = jnp.maximum(h, 0.0)

    # Fused heads: columns [0, A) = mu, [A, 2A) = log_std, rest = zero padding
    # (padding only exists to keep the output store lane-dense).
    out = jnp.dot(h.astype(mm_dtype), wh_ref[...],
                  preferred_element_type=jnp.float32) + bh_ref[...]

    # Per-lane bounds precomputed on the host: mu / padding lanes get -inf/+inf
    # (pass-through), log_std lanes get [-20, 2].  Replaces iota+clip+where.
    out = jnp.minimum(jnp.maximum(out, lo_ref[...]), hi_ref[...])
    out_ref[...] = out.astype(out_ref.dtype)


# ---------------------------------------------------------------------------
# Wrapper
# ---------------------------------------------------------------------------
def actor_forward(x, params, *, tile_b_max=2048, out_dtype=jnp.float32,
                  weight_buffer_count=None, vmem_limit_bytes=None):
    """x: [B, state_dim].  params: output of fold_params().

    out_dtype: dtype of the padded output slab (use jnp.bfloat16 on v5e to
      halve the output HBM writeback; f32 for exact parity).
    weight_buffer_count: set to 1 on v7x with large hidden so the resident
      weights are single-buffered (VMEM headroom); None = compiler default.
    """
    B, state_dim = x.shape
    hidden = params["w1"].shape[1]
    action_dim = params["action_dim"]
    out_pad = params["wh"].shape[1]
    mm_dtype = params["w1"].dtype

    # Cast the streamed input to the matmul dtype so its DMA matches.
    x = x.astype(mm_dtype)

    # Balanced batch tiles; weights stay VMEM-resident across grid steps.
    tile_b, B_pad, n_tiles = _pick_batch_tiling(B, tile_b_max)
    if B_pad != B:
        x = jnp.pad(x, ((0, B_pad - B), (0, 0)))
    grid = (n_tiles,)

    flops = 2 * B_pad * (state_dim * hidden + hidden * hidden + hidden * out_pad)
    bytes_accessed = (
        B_pad * state_dim * jnp.dtype(mm_dtype).itemsize
        + sum(params[k].size * params[k].dtype.itemsize
              for k in ("w1", "b1", "w2", "b2", "wh", "bh", "lo", "hi"))
        + B_pad * out_pad * jnp.dtype(out_dtype).itemsize
    )

    kernel = functools.partial(actor_kernel, mm_dtype=mm_dtype)

    const = lambda i: (0, 0)  # weights/biases/bounds: same block every step

    def const_spec(shape):
        if weight_buffer_count is None:
            return pl.BlockSpec(shape, const)
        return pl.BlockSpec(shape, const,
                            pipeline_mode=pl.Buffered(weight_buffer_count))

    cp_kwargs = dict(dimension_semantics=("parallel",))
    if vmem_limit_bytes is not None:
        cp_kwargs["vmem_limit_bytes"] = vmem_limit_bytes

    out = pl.pallas_call(
        kernel,
        out_shape=jax.ShapeDtypeStruct((B_pad, out_pad), out_dtype),
        grid=grid,
        in_specs=[
            pl.BlockSpec((tile_b, state_dim), lambda i: (i, 0)),   # x stream
            const_spec(params["w1"].shape),
            const_spec(params["b1"].shape),
            const_spec(params["w2"].shape),
            const_spec(params["b2"].shape),
            const_spec(params["wh"].shape),
            const_spec(params["bh"].shape),
            const_spec(params["lo"].shape),
            const_spec(params["hi"].shape),
        ],
        out_specs=pl.BlockSpec((tile_b, out_pad), lambda i: (i, 0)),
        compiler_params=pltpu.CompilerParams(**cp_kwargs),
        cost_estimate=pl.CostEstimate(flops=flops, transcendentals=0,
                                      bytes_accessed=bytes_accessed),
    )(x, params["w1"], params["b1"], params["w2"], params["b2"],
      params["wh"], params["bh"], params["lo"], params["hi"])

    mu = out[:B, :action_dim]
    log_std = out[:B, action_dim:2 * action_dim]
    return mu, log_std


# ---------------------------------------------------------------------------
# Parameter prep (host-side, one-time)
# ---------------------------------------------------------------------------
def fold_params(raw, matmul_dtype=jnp.bfloat16):
    """Fold (x - xmean)/xstd into fc1, fuse/pad the heads, build clamp bounds.

    matmul_dtype: bf16 (default; ~2x MXU throughput + half the weight DMA on
    every generation) or f32 (exact parity).  Biases / bounds stay f32 so all
    elementwise math is f32.
    """
    inv_std = 1.0 / raw["xstd"]                                # [1, state_dim]
    w1 = raw["w1"] * inv_std.T                                 # row-scale
    b1 = raw["b1"] - (raw["xmean"] * inv_std) @ raw["w1"]

    action_dim = raw["wmu"].shape[1]
    hidden = raw["w1"].shape[1]
    out_pad = max(LANE, _round_up(2 * action_dim, LANE))       # lane-dense out

    wh = jnp.zeros((hidden, out_pad), jnp.float32)
    wh = wh.at[:, :action_dim].set(raw["wmu"])
    wh = wh.at[:, action_dim:2 * action_dim].set(raw["wls"])
    bh = jnp.zeros((1, out_pad), jnp.float32)
    bh = bh.at[:, :action_dim].set(raw["bmu"])
    bh = bh.at[:, action_dim:2 * action_dim].set(raw["bls"])

    # Per-lane clamp bounds: pass-through (+/-inf) on mu and padding lanes,
    # [LOG_SIG_MIN, LOG_SIG_MAX] on the log_std lanes.
    lo = jnp.full((1, out_pad), -jnp.inf, jnp.float32)
    hi = jnp.full((1, out_pad), jnp.inf, jnp.float32)
    lo = lo.at[:, action_dim:2 * action_dim].set(LOG_SIG_MIN)
    hi = hi.at[:, action_dim:2 * action_dim].set(LOG_SIG_MAX)

    return {
        "w1": w1.astype(matmul_dtype),
        "b1": b1.astype(jnp.float32),
        "w2": raw["w2"].astype(matmul_dtype),
        "b2": raw["b2"].astype(jnp.float32),
        "wh": wh.astype(matmul_dtype),
        "bh": bh.astype(jnp.float32),
        "lo": lo,
        "hi": hi,
        "action_dim": action_dim,
    }


def _xavier_uniform(key, fan_in, fan_out, gain=1.0):
    limit = gain * jnp.sqrt(6.0 / (fan_in + fan_out))
    return jax.random.uniform(key, (fan_in, fan_out), jnp.float32,
                              minval=-limit, maxval=limit)


def init_raw_params(key, state_dim, action_dim, hidden_dim):
    k1, k2, k3, k4, k5, k6 = jax.random.split(key, 6)
    return {
        "w1": _xavier_uniform(k1, state_dim, hidden_dim),
        "b1": jnp.zeros((1, hidden_dim), jnp.float32),
        "w2": _xavier_uniform(k2, hidden_dim, hidden_dim),
        "b2": jnp.zeros((1, hidden_dim), jnp.float32),
        "wmu": _xavier_uniform(k3, hidden_dim, action_dim),
        "bmu": jnp.zeros((1, action_dim), jnp.float32),
        "wls": _xavier_uniform(k4, hidden_dim, action_dim),
        "bls": jnp.zeros((1, action_dim), jnp.float32),
        "xmean": jax.random.normal(k5, (1, state_dim), jnp.float32),
        "xstd": jax.random.uniform(k6, (1, state_dim), jnp.float32,
                                   minval=0.5, maxval=1.5),
    }


def actor_reference(x, raw):
    """Pure-JAX reference of the original (un-folded) forward pass."""
    h = (x - raw["xmean"]) / raw["xstd"]
    h = jnp.maximum(h @ raw["w1"] + raw["b1"], 0.0)
    h = jnp.maximum(h @ raw["w2"] + raw["b2"], 0.0)
    mu = h @ raw["wmu"] + raw["bmu"]
    ls = jnp.clip(h @ raw["wls"] + raw["bls"], LOG_SIG_MIN, LOG_SIG_MAX)
    return mu, ls


if __name__ == "__main__":
    # TODO(synk): the original module's `.cuda()` device transfer has no Pallas
    # equivalent (arrays already live on the TPU); everything else is implemented.
    key = jax.random.PRNGKey(0)
    k_params, k_x = jax.random.split(key)

    batch = 16          # >= 16 so the grid has 2 steps (v7x megacore path)
    state_dim = 16
    action_dim = 8
    hidden_dim = 32     # small stand-in for the default 256 (keep a multiple of
                        # 128/256 in real use so MXU K/N dims are not padded)

    raw = init_raw_params(k_params, state_dim, action_dim, hidden_dim)
    x = jax.random.normal(k_x, (batch, state_dim), jnp.float32)

    mu_ref, ls_ref = actor_reference(x, raw)

    # --- exact (f32 operands, f32 output) parity path ------------------------
    params_f32 = fold_params(raw, jnp.float32)
    mu, log_std = actor_forward(x, params_f32, out_dtype=jnp.float32)
    jax.block_until_ready((mu, log_std))

    assert mu.shape == (batch, action_dim)
    assert log_std.shape == (batch, action_dim)
    # Normalization fold reorders f32 rounding -> allow ~1e-6-level slack.
    assert jnp.allclose(mu, mu_ref, atol=1e-4, rtol=1e-4)
    assert jnp.allclose(log_std, ls_ref, atol=1e-4, rtol=1e-4)
    assert float(log_std.max()) <= LOG_SIG_MAX + 1e-6
    assert float(log_std.min()) >= LOG_SIG_MIN - 1e-6

    # --- default perf path: bf16 MXU operands + bf16 output slab -------------
    params_bf16 = fold_params(raw)                     # bf16 by default
    mu_b, log_std_b = actor_forward(x, params_bf16, out_dtype=jnp.bfloat16)
    jax.block_until_ready((mu_b, log_std_b))

    assert mu_b.shape == (batch, action_dim)
    assert bool(jnp.all(jnp.isfinite(mu_b.astype(jnp.float32))))
    assert bool(jnp.all(jnp.isfinite(log_std_b.astype(jnp.float32))))
    assert float(log_std_b.max()) <= LOG_SIG_MAX + 1e-2
    assert float(log_std_b.min()) >= LOG_SIG_MIN - 1e-2
    # Coarse sanity bound only (bf16 operand/output quantization).
    assert float(jnp.max(jnp.abs(mu_b.astype(jnp.float32) - mu_ref))) < 0.5
    assert float(jnp.max(jnp.abs(log_std_b.astype(jnp.float32) - ls_ref))) < 0.5

    print("KERNEL_OK")
</pallas_src>

<mosaic_0001>
module attributes {stable_mosaic.version = 11 : i64} {
  func.func @actor_kernel(%arg0: i32, %arg1: memref<8x16xf32, #tpu.memory_space<vmem>>, %arg2: memref<16x32xf32, #tpu.memory_space<vmem>>, %arg3: memref<1x32xf32, #tpu.memory_space<vmem>>, %arg4: memref<32x32xf32, #tpu.memory_space<vmem>>, %arg5: memref<1x32xf32, #tpu.memory_space<vmem>>, %arg6: memref<32x128xf32, #tpu.memory_space<vmem>>, %arg7: memref<1x128xf32, #tpu.memory_space<vmem>>, %arg8: memref<1x128xf32, #tpu.memory_space<vmem>>, %arg9: memref<1x128xf32, #tpu.memory_space<vmem>>, %arg10: memref<8x128xf32, #tpu.memory_space<vmem>>) attributes {dimension_semantics = [#tpu.dimension_semantics<parallel>], iteration_bounds = array<i64: 2>, scalar_prefetch = 0 : i64, scratch_operands = 0 : i64, tpu.core_type = #tpu.core_type<tc>, window_params = [{transform_indices = @transform_0, window_bounds = array<i64: 8, 16>}, {pipeline_mode = #tpu.pipeline_mode<synchronous>, transform_indices = @transform_1, window_bounds = array<i64: 16, 32>}, {pipeline_mode = #tpu.pipeline_mode<synchronous>, transform_indices = @transform_2, window_bounds = array<i64: 1, 32>}, {pipeline_mode = #tpu.pipeline_mode<synchronous>, transform_indices = @transform_3, window_bounds = array<i64: 32, 32>}, {pipeline_mode = #tpu.pipeline_mode<synchronous>, transform_indices = @transform_4, window_bounds = array<i64: 1, 32>}, {pipeline_mode = #tpu.pipeline_mode<synchronous>, transform_indices = @transform_5, window_bounds = array<i64: 32, 128>}, {pipeline_mode = #tpu.pipeline_mode<synchronous>, transform_indices = @transform_6, window_bounds = array<i64: 1, 128>}, {pipeline_mode = #tpu.pipeline_mode<synchronous>, transform_indices = @transform_7, window_bounds = array<i64: 1, 128>}, {pipeline_mode = #tpu.pipeline_mode<synchronous>, transform_indices = @transform_8, window_bounds = array<i64: 1, 128>}, {transform_indices = @transform_9, window_bounds = array<i64: 8, 128>}]} {
    %c0 = arith.constant 0 : index
    %c0_0 = arith.constant 0 : index
    %0 = vector.load %arg1[%c0, %c0_0] : memref<8x16xf32, #tpu.memory_space<vmem>>, vector<8x16xf32>
    %c0_1 = arith.constant 0 : index
    %c0_2 = arith.constant 0 : index
    %1 = vector.load %arg2[%c0_1, %c0_2] : memref<16x32xf32, #tpu.memory_space<vmem>>, vector<16x32xf32>
    %cst = arith.constant dense<0.000000e+00> : vector<8x32xf32>
    %2 = tpu.matmul %0, %1, %cst {dimension_numbers = #tpu.dot_dimension_numbers<[1], [0], [0], [1], [0, 0, 1, 1], [], []>} : vector<8x16xf32>, vector<16x32xf32>, vector<8x32xf32> -> vector<8x32xf32>
    %c0_3 = arith.constant 0 : index
    %c0_4 = arith.constant 0 : index
    %3 = vector.load %arg3[%c0_3, %c0_4] : memref<1x32xf32, #tpu.memory_space<vmem>>, vector<1x32xf32>
    %4 = vector.broadcast %3 : vector<1x32xf32> to vector<8x32xf32>
    %5 = arith.addf %2, %4 : vector<8x32xf32>
    %cst_5 = arith.constant 0.000000e+00 : f32
    %6 = vector.broadcast %cst_5 : f32 to vector<8x32xf32>
    %7 = arith.maximumf %5, %6 : vector<8x32xf32>
    %c0_6 = arith.constant 0 : index
    %c0_7 = arith.constant 0 : index
    %8 = vector.load %arg4[%c0_6, %c0_7] : memref<32x32xf32, #tpu.memory_space<vmem>>, vector<32x32xf32>
    %cst_8 = arith.constant dense<0.000000e+00> : vector<8x32xf32>
    %9 = tpu.matmul %7, %8, %cst_8 {dimension_numbers = #tpu.dot_dimension_numbers<[1], [0], [0], [1], [0, 0, 1, 1], [], []>} : vector<8x32xf32>, vector<32x32xf32>, vector<8x32xf32> -> vector<8x32xf32>
    %c0_9 = arith.constant 0 : index
    %c0_10 = arith.constant 0 : index
    %10 = vector.load %arg5[%c0_9, %c0_10] : memref<1x32xf32, #tpu.memory_space<vmem>>, vector<1x32xf32>
    %11 = vector.broadcast %10 : vector<1x32xf32> to vector<8x32xf32>
    %12 = arith.addf %9, %11 : vector<8x32xf32>
    %cst_11 = arith.constant 0.000000e+00 : f32
    %13 = vector.broadcast %cst_11 : f32 to vector<8x32xf32>
    %14 = arith.maximumf %12, %13 : vector<8x32xf32>
    %c0_12 = arith.constant 0 : index
    %c0_13 = arith.constant 0 : index
    %15 = vector.load %arg6[%c0_12, %c0_13] : memref<32x128xf32, #tpu.memory_space<vmem>>, vector<32x128xf32>
    %cst_14 = arith.constant dense<0.000000e+00> : vector<8x128xf32>
    %16 = tpu.matmul %14, %15, %cst_14 {dimension_numbers = #tpu.dot_dimension_numbers<[1], [0], [0], [1], [0, 0, 1, 1], [], []>} : vector<8x32xf32>, vector<32x128xf32>, vector<8x128xf32> -> vector<8x128xf32>
    %c0_15 = arith.constant 0 : index
    %c0_16 = arith.constant 0 : index
    %17 = vector.load %arg7[%c0_15, %c0_16] : memref<1x128xf32, #tpu.memory_space<vmem>>, vector<1x128xf32>
    %18 = vector.broadcast %17 : vector<1x128xf32> to vector<8x128xf32>
    %19 = arith.addf %16, %18 : vector<8x128xf32>
    %c0_17 = arith.constant 0 : index
    %c0_18 = arith.constant 0 : index
    %20 = vector.load %arg8[%c0_17, %c0_18] : memref<1x128xf32, #tpu.memory_space<vmem>>, vector<1x128xf32>
    %21 = vector.broadcast %20 : vector<1x128xf32> to vector<8x128xf32>
    %22 = arith.maximumf %19, %21 : vector<8x128xf32>
    %c0_19 = arith.constant 0 : index
    %c0_20 = arith.constant 0 : index
    %23 = vector.load %arg9[%c0_19, %c0_20] : memref<1x128xf32, #tpu.memory_space<vmem>>, vector<1x128xf32>
    %24 = vector.broadcast %23 : vector<1x128xf32> to vector<8x128xf32>
    %25 = arith.minimumf %22, %24 : vector<8x128xf32>
    %c0_21 = arith.constant 0 : index
    %c0_22 = arith.constant 0 : index
    %26 = vector.load %arg10[%c0_21, %c0_22] : memref<8x128xf32, #tpu.memory_space<vmem>>, vector<8x128xf32>
    tpu.vector_store %arg10[%c0_21, %c0_22], %25 {strides = array<i32>} : memref<8x128xf32, #tpu.memory_space<vmem>>, vector<8x128xf32>,
    return
  }
  func.func @transform_0(%arg0: i32) -> (i32, i32) {
    %c0_i32 = arith.constant 0 : i32
    %c0_i32_0 = arith.constant 0 : i32
    return %arg0, %c0_i32 : i32, i32
  }
  func.func @transform_1(%arg0: i32) -> (i32, i32) {
    %c0_i32 = arith.constant 0 : i32
    %c0_i32_0 = arith.constant 0 : i32
    %c0_i32_1 = arith.constant 0 : i32
    return %c0_i32, %c0_i32_0 : i32, i32
  }
  func.func @transform_2(%arg0: i32) -> (i32, i32) {
    %c0_i32 = arith.constant 0 : i32
    %c0_i32_0 = arith.constant 0 : i32
    %c0_i32_1 = arith.constant 0 : i32
    return %c0_i32, %c0_i32_0 : i32, i32
  }
  func.func @transform_3(%arg0: i32) -> (i32, i32) {
    %c0_i32 = arith.constant 0 : i32
    %c0_i32_0 = arith.constant 0 : i32
    %c0_i32_1 = arith.constant 0 : i32
    return %c0_i32, %c0_i32_0 : i32, i32
  }
  func.func @transform_4(%arg0: i32) -> (i32, i32) {
    %c0_i32 = arith.constant 0 : i32
    %c0_i32_0 = arith.constant 0 : i32
    %c0_i32_1 = arith.constant 0 : i32
    return %c0_i32, %c0_i32_0 : i32, i32
  }
  func.func @transform_5(%arg0: i32) -> (i32, i32) {
    %c0_i32 = arith.constant 0 : i32
    %c0_i32_0 = arith.constant 0 : i32
    %c0_i32_1 = arith.constant 0 : i32
    return %c0_i32, %c0_i32_0 : i32, i32
  }
  func.func @transform_6(%arg0: i32) -> (i32, i32) {
    %c0_i32 = arith.constant 0 : i32
    %c0_i32_0 = arith.constant 0 : i32
    %c0_i32_1 = arith.constant 0 : i32
    return %c0_i32, %c0_i32_0 : i32, i32
  }
  func.func @transform_7(%arg0: i32) -> (i32, i32) {
    %c0_i32 = arith.constant 0 : i32
    %c0_i32_0 = arith.constant 0 : i32
    %c0_i32_1 = arith.constant 0 : i32
    return %c0_i32, %c0_i32_0 : i32, i32
  }
  func.func @transform_8(%arg0: i32) -> (i32, i32) {
    %c0_i32 = arith.constant 0 : i32
    %c0_i32_0 = arith.constant 0 : i32
    %c0_i32_1 = arith.constant 0 : i32
    return %c0_i32, %c0_i32_0 : i32, i32
  }
  func.func @transform_9(%arg0: i32) -> (i32, i32) {
    %c0_i32 = arith.constant 0 : i32
    %c0_i32_0 = arith.constant 0 : i32
    return %arg0, %c0_i32 : i32, i32
  }
}

</mosaic_0001>

<llo_original>
// kernel: tpu_custom_call.1
$region0: #{tpu_custom_call.1}
  #allocation0 [shape = 'u32[]', space=smem, size = 0x4, offset = 0x4, fixed_abs, tag = 'smem constant byte address 0x4 - core index']
  #allocation1 [shape = 'u32[144,128]{1,0:T(1,128)}', space=vmem, size = 0x12000, scoped, tag = 'internal scratch']
  %s0 = inlined_call_operand.hbm [shape: f32[16,16], index: 0, kind: input, shape index: {}]
  %s1 = inlined_call_operand.hbm [shape: f32[16,32], index: 1, kind: input, shape index: {}]
  %s2 = inlined_call_operand.vmem [shape: f32[1,32], index: 2, kind: input, shape index: {}]
  %s3 = inlined_call_operand.hbm [shape: f32[32,32], index: 3, kind: input, shape index: {}]
  %s4 = inlined_call_operand.vmem [shape: f32[1,32], index: 4, kind: input, shape index: {}]
  %s5 = inlined_call_operand.hbm [shape: f32[32,128], index: 5, kind: input, shape index: {}]
  %s6 = inlined_call_operand.vmem [shape: f32[1,128], index: 6, kind: input, shape index: {}]
  %s7 = inlined_call_operand.vmem [shape: f32[1,128], index: 7, kind: input, shape index: {}]
  %s8 = inlined_call_operand.vmem [shape: f32[1,128], index: 8, kind: input, shape index: {}]
  %s9 = inlined_call_operand.hbm [shape: f32[16,128], index: 9, kind: output, shape index: {}]
  %s10 = sld [smem:[#allocation0]]
  $region85: #{tpu_custom_call.1} parent=0
    _
  %s12 = ssub.s32 1, %s10
  %s13 = scalar_select 0, %s12, %s10
  $region1: #{tpu_custom_call.1} parent=0
    #allocation2 [shape = 'u8[8192]{0}', space=vmem, size = 0x2000, scoped, tag = 'input window, operand 0']
    #allocation3 [shape = 's32[2]{0}', space=sflag, size = 0x8, scoped, tag = 'scoped memory for tpu_custom_call.1']
    #allocation4 [shape = 's32[2]{0}', space=sflag, size = 0x8, scoped, tag = 'scoped memory for tpu_custom_call.1']
    #allocation5 [shape = 'u8[8192]{0}', space=vmem, size = 0x2000, scoped, tag = 'input window, operand 1, single buffered']
    #allocation6 [shape = 's32[1]{0}', space=sflag, size = 0x4, scoped, tag = 'scoped memory for tpu_custom_call.1']
    #allocation7 [shape = 'u8[16384]{0}', space=vmem, size = 0x4000, scoped, tag = 'input window, operand 3, single buffered']
    #allocation8 [shape = 'u8[16384]{0}', space=vmem, size = 0x4000, scoped, tag = 'input window, operand 5, single buffered']
    #allocation9 [shape = 's32[1]{0}', space=sflag, size = 0x4, scoped, tag = 'scoped memory for tpu_custom_call.1']
    #allocation10 [shape = 'u8[8192]{0}', space=vmem, size = 0x2000, scoped, tag = 'output window, operand 0']
    %14 = vsyncpa [#allocation3], 0
    %s15 = scalar_lea.sflag [#allocation3], 1
    %16 = vsyncpa %s15, 0
    %17 = vsyncpa [#allocation6], 0
    %18 = vsyncpa [#allocation9], 0
    %19 = vsyncpa [#allocation4], 0
    %s20 = scalar_lea.sflag [#allocation4], 1
    %21 = vsyncpa %s20, 0
    loop: start=0, step=1, limit=4
    $region2: #{tpu_custom_call.1} parent=1 // loop_pre_header
      _
    $region3: #{tpu_custom_call.1} parent=1 // loop_header
      %s23 = sphi 0, %s27
      %p24 = scmp.ge.s32.totalorder %s23, 4
      %s33 = sphi 0, %s35
      %s36 = sphi 0, %s33
      %s37 = sphi 0, %s36
      %s53 = sphi 0, %s37
      %s57 = sphi 0, %s57
      %s59 = sphi 0, %s57
      %s60 = sphi 0, %s59
      %s74 = sphi 0, %s60
      %s78 = sphi 0, %s78
      %s80 = sphi 0, %s78
      %s81 = sphi 0, %s80
      %s95 = sphi 0, %s81
      %s99 = sphi 0, %s99
      %s101 = sphi 0, %s99
      %s102 = sphi 0, %s101
      %s116 = sphi 0, %s102
      %s120 = sphi 0, %s120
      %s122 = sphi 0, %s120
      %s123 = sphi 0, %s122
      %s137 = sphi 0, %s123
      %s141 = sphi 0, %s141
      %s143 = sphi 0, %s141
      %s144 = sphi 0, %s143
      %s158 = sphi 0, %s144
      %s162 = sphi 0, %s162
      %s164 = sphi 0, %s162
      %s165 = sphi 0, %s164
      %s179 = sphi 0, %s165
      %s183 = sphi 0, %s183
      %s185 = sphi 0, %s183
      %s186 = sphi 0, %s185
      %s200 = sphi 0, %s186
      %s204 = sphi 0, %s204
      %s206 = sphi 0, %s204
      %s207 = sphi 0, %s206
      %s221 = sphi 0, %s207
      %s227 = sphi 0, %s229
      %s230 = sphi 0, %s227
      %s231 = sphi 0, %s230
      %s247 = sphi 0, %s231
    $region4: #{tpu_custom_call.1} parent=1 // loop_header_branch
      %26 = sbr.rel (%p24) target = $region8
    $region5: #{tpu_custom_call.1} parent=1 // loop_body
      %s28 = ssub.s32 %s23, 1
      %s29 = ssub.s32 %s23, 2
      %s30 = sadd.s32 %s23, 1
      %s31 = ssub.s32 %s23, %s30
      %p32 = scmp.eq.s32.totalorder %s31, 0
      %s34 = sadd.s32 %s33, 1
      %s35 = scalar_select %p32, %s33, %s34
      %p38 = pneg %p32
      %p39 = scmp.eq.s32.totalorder %s23, 1
      %p40 = por %p38, %p39
      %p41 = scmp.ne.s32.totalorder %s33, %s36
      %p42 = scmp.eq.s32.totalorder %s23, 0
      %p43 = por %p41, %p42
      %p44 = scmp.ne.s32.totalorder %s33, %s36
      %p45 = scmp.eq.s32.totalorder %s28, 1
      %p46 = por %p44, %p45
      %p47 = scmp.ne.s32.totalorder %s36, %s37
      %p48 = scmp.eq.s32.totalorder %s28, 0
      %p49 = por %p47, %p48
      %p50 = scmp.ne.s32.totalorder %s36, %s37
      %p51 = scmp.eq.s32.totalorder %s29, 1
      %p52 = por %p50, %p51
      %p54 = scmp.ne.s32.totalorder %s37, %s53
      %p55 = scmp.eq.s32.totalorder %s29, 0
      %p56 = por %p54, %p55
      %s58 = sadd.s32 %s57, 1
      %p61 = scmp.eq.s32.totalorder %s23, 1
      %p62 = scmp.ne.s32.totalorder %s57, %s59
      %p63 = scmp.eq.s32.totalorder %s23, 0
      %p64 = por %p62, %p63
      %p65 = scmp.ne.s32.totalorder %s57, %s59
      %p66 = scmp.eq.s32.totalorder %s28, 1
      %p67 = por %p65, %p66
      %p68 = scmp.ne.s32.totalorder %s59, %s60
      %p69 = scmp.eq.s32.totalorder %s28, 0
      %p70 = por %p68, %p69
      %p71 = scmp.ne.s32.totalorder %s59, %s60
      %p72 = scmp.eq.s32.totalorder %s29, 1
      %p73 = por %p71, %p72
      %p75 = scmp.ne.s32.totalorder %s60, %s74
      %p76 = scmp.eq.s32.totalorder %s29, 0
      %p77 = por %p75, %p76
      %s79 = sadd.s32 %s78, 1
      %p82 = scmp.eq.s32.totalorder %s23, 1
      %p83 = scmp.ne.s32.totalorder %s78, %s80
      %p84 = scmp.eq.s32.totalorder %s23, 0
      %p85 = por %p83, %p84
      %p86 = scmp.ne.s32.totalorder %s78, %s80
      %p87 = scmp.eq.s32.totalorder %s28, 1
      %p88 = por %p86, %p87
      %p89 = scmp.ne.s32.totalorder %s80, %s81
      %p90 = scmp.eq.s32.totalorder %s28, 0
      %p91 = por %p89, %p90
      %p92 = scmp.ne.s32.totalorder %s80, %s81
      %p93 = scmp.eq.s32.totalorder %s29, 1
      %p94 = por %p92, %p93
      %p96 = scmp.ne.s32.totalorder %s81, %s95
      %p97 = scmp.eq.s32.totalorder %s29, 0
      %p98 = por %p96, %p97
      %s100 = sadd.s32 %s99, 1
      %p103 = scmp.eq.s32.totalorder %s23, 1
      %p104 = scmp.ne.s32.totalorder %s99, %s101
      %p105 = scmp.eq.s32.totalorder %s23, 0
      %p106 = por %p104, %p105
      %p107 = scmp.ne.s32.totalorder %s99, %s101
      %p108 = scmp.eq.s32.totalorder %s28, 1
      %p109 = por %p107, %p108
      %p110 = scmp.ne.s32.totalorder %s101, %s102
      %p111 = scmp.eq.s32.totalorder %s28, 0
      %p112 = por %p110, %p111
      %p113 = scmp.ne.s32.totalorder %s101, %s102
      %p114 = scmp.eq.s32.totalorder %s29, 1
      %p115 = por %p113, %p114
      %p117 = scmp.ne.s32.totalorder %s102, %s116
      %p118 = scmp.eq.s32.totalorder %s29, 0
      %p119 = por %p117, %p118
      %s121 = sadd.s32 %s120, 1
      %p124 = scmp.eq.s32.totalorder %s23, 1
      %p125 = scmp.ne.s32.totalorder %s120, %s122
      %p126 = scmp.eq.s32.totalorder %s23, 0
      %p127 = por %p125, %p126
      %p128 = scmp.ne.s32.totalorder %s120, %s122
      %p129 = scmp.eq.s32.totalorder %s28, 1
      %p130 = por %p128, %p129
      %p131 = scmp.ne.s32.totalorder %s122, %s123
      %p132 = scmp.eq.s32.totalorder %s28, 0
      %p133 = por %p131, %p132
      %p134 = scmp.ne.s32.totalorder %s122, %s123
      %p135 = scmp.eq.s32.totalorder %s29, 1
      %p136 = por %p134, %p135
      %p138 = scmp.ne.s32.totalorder %s123, %s137
      %p139 = scmp.eq.s32.totalorder %s29, 0
      %p140 = por %p138, %p139
      %s142 = sadd.s32 %s141, 1
      %p145 = scmp.eq.s32.totalorder %s23, 1
      %p146 = scmp.ne.s32.totalorder %s141, %s143
      %p147 = scmp.eq.s32.totalorder %s23, 0
      %p148 = por %p146, %p147
      %p149 = scmp.ne.s32.totalorder %s141, %s143
      %p150 = scmp.eq.s32.totalorder %s28, 1
      %p151 = por %p149, %p150
      %p152 = scmp.ne.s32.totalorder %s143, %s144
      %p153 = scmp.eq.s32.totalorder %s28, 0
      %p154 = por %p152, %p153
      %p155 = scmp.ne.s32.totalorder %s143, %s144
      %p156 = scmp.eq.s32.totalorder %s29, 1
      %p157 = por %p155, %p156
      %p159 = scmp.ne.s32.totalorder %s144, %s158
      %p160 = scmp.eq.s32.totalorder %s29, 0
      %p161 = por %p159, %p160
      %s163 = sadd.s32 %s162, 1
      %p166 = scmp.eq.s32.totalorder %s23, 1
      %p167 = scmp.ne.s32.totalorder %s162, %s164
      %p168 = scmp.eq.s32.totalorder %s23, 0
      %p169 = por %p167, %p168
      %p170 = scmp.ne.s32.totalorder %s162, %s164
      %p171 = scmp.eq.s32.totalorder %s28, 1
      %p172 = por %p170, %p171
      %p173 = scmp.ne.s32.totalorder %s164, %s165
      %p174 = scmp.eq.s32.totalorder %s28, 0
      %p175 = por %p173, %p174
      %p176 = scmp.ne.s32.totalorder %s164, %s165
      %p177 = scmp.eq.s32.totalorder %s29, 1
      %p178 = por %p176, %p177
      %p180 = scmp.ne.s32.totalorder %s165, %s179
      %p181 = scmp.eq.s32.totalorder %s29, 0
      %p182 = por %p180, %p181
      %s184 = sadd.s32 %s183, 1
      %p187 = scmp.eq.s32.totalorder %s23, 1
      %p188 = scmp.ne.s32.totalorder %s183, %s185
      %p189 = scmp.eq.s32.totalorder %s23, 0
      %p190 = por %p188, %p189
      %p191 = scmp.ne.s32.totalorder %s183, %s185
      %p192 = scmp.eq.s32.totalorder %s28, 1
      %p193 = por %p191, %p192
      %p194 = scmp.ne.s32.totalorder %s185, %s186
      %p195 = scmp.eq.s32.totalorder %s28, 0
      %p196 = por %p194, %p195
      %p197 = scmp.ne.s32.totalorder %s185, %s186
      %p198 = scmp.eq.s32.totalorder %s29, 1
      %p199 = por %p197, %p198
      %p201 = scmp.ne.s32.totalorder %s186, %s200
      %p202 = scmp.eq.s32.totalorder %s29, 0
      %p203 = por %p201, %p202
      %s205 = sadd.s32 %s204, 1
      %p208 = scmp.eq.s32.totalorder %s23, 1
      %p209 = scmp.ne.s32.totalorder %s204, %s206
      %p210 = scmp.eq.s32.totalorder %s23, 0
      %p211 = por %p209, %p210
      %p212 = scmp.ne.s32.totalorder %s204, %s206
      %p213 = scmp.eq.s32.totalorder %s28, 1
      %p214 = por %p212, %p213
      %p215 = scmp.ne.s32.totalorder %s206, %s207
      %p216 = scmp.eq.s32.totalorder %s28, 0
      %p217 = por %p215, %p216
      %p218 = scmp.ne.s32.totalorder %s206, %s207
      %p219 = scmp.eq.s32.totalorder %s29, 1
      %p220 = por %p218, %p219
      %p222 = scmp.ne.s32.totalorder %s207, %s221
      %p223 = scmp.eq.s32.totalorder %s29, 0
      %p224 = por %p222, %p223
      %s225 = ssub.s32 %s23, %s30
      %p226 = scmp.eq.s32.totalorder %s225, 0
      %s228 = sadd.s32 %s227, 1
      %s229 = scalar_select %p226, %s227, %s228
      %p232 = pneg %p226
      %p233 = scmp.eq.s32.totalorder %s23, 1
      %p234 = por %p232, %p233
      %p235 = scmp.ne.s32.totalorder %s227, %s230
      %p236 = scmp.eq.s32.totalorder %s23, 0
      %p237 = por %p235, %p236
      %p238 = scmp.ne.s32.totalorder %s227, %s230
      %p239 = scmp.eq.s32.totalorder %s28, 1
      %p240 = por %p238, %p239
      %p241 = scmp.ne.s32.totalorder %s230, %s231
      %p242 = scmp.eq.s32.totalorder %s28, 0
      %p243 = por %p241, %p242
      %p244 = scmp.ne.s32.totalorder %s230, %s231
      %p245 = scmp.eq.s32.totalorder %s29, 1
      %p246 = por %p244, %p245
      %p248 = scmp.ne.s32.totalorder %s231, %s247
      %p249 = scmp.eq.s32.totalorder %s29, 0
      %p250 = por %p248, %p249
      %p251 = scmp.le.s32.totalorder 1, %s23
      %p252 = scmp.lt.s32.totalorder %s23, 3
      %p253 = pnand %p251, %p252
      %p254 = pneg %p253
      // Predicated region
      $region9: #{tpu_custom_call.1} parent=5 // pred_check
        _
      $region10: #{tpu_custom_call.1} parent=5 // pred_check_branch
        %256 = sbr.rel (%p253) target = $region12
      $region11: #{tpu_custom_call.1} parent=5 // pred_region
        %s257 = ssub.s32 %s23, 1
        // Predicated region
        $region13: #{tpu_custom_call.1} parent=11 // pred_check
          %p258 = pneg %p70
        $region14: #{tpu_custom_call.1} parent=11 // pred_check_branch
          %260 = sbr.rel (%p258) target = $region16
        $region15: #{tpu_custom_call.1} parent=11 // pred_region
          %s262 = ssub.s32 256, 256
          %263 = vsyncadd [#allocation6], %s262
          %s264 = sshll.u32 [#allocation5], 4
          %s265 = int_to_ptr.vmem [resolvable:$true] %s264
          %270 = dma.hbm_to_vmem [thread:$0]  %s1, 256, %s265, [#allocation6], 128, 128, 8
        $region16: #{tpu_custom_call.1} parent=11 // pred_fallthru
          _
        // Predicated region
        $region17: #{tpu_custom_call.1} parent=11 // pred_check
          %p271 = pneg %p91
        $region18: #{tpu_custom_call.1} parent=11 // pred_check_branch
          %273 = sbr.rel (%p271) target = $region20
        $region19: #{tpu_custom_call.1} parent=11 // pred_region
          _
        $region20: #{tpu_custom_call.1} parent=11 // pred_fallthru
          _
        // Predicated region
        $region21: #{tpu_custom_call.1} parent=11 // pred_check
          %p274 = pneg %p112
        $region22: #{tpu_custom_call.1} parent=11 // pred_check_branch
          %276 = sbr.rel (%p274) target = $region24
        $region23: #{tpu_custom_call.1} parent=11 // pred_region
          %s278 = ssub.s32 512, 512
          %279 = vsyncadd [#allocation6], %s278
          %s280 = sshll.u32 [#allocation7], 4
          %s281 = int_to_ptr.vmem [resolvable:$true] %s280
          %286 = dma.hbm_to_vmem [thread:$0]  %s3, 512, %s281, [#allocation6], 128, 128, 8
        $region24: #{tpu_custom_call.1} parent=11 // pred_fallthru
          _
        // Predicated region
        $region25: #{tpu_custom_call.1} parent=11 // pred_check
          %p287 = pneg %p133
        $region26: #{tpu_custom_call.1} parent=11 // pred_check_branch
          %289 = sbr.rel (%p287) target = $region28
        $region27: #{tpu_custom_call.1} parent=11 // pred_region
          _
        $region28: #{tpu_custom_call.1} parent=11 // pred_fallthru
          _
        // Predicated region
        $region29: #{tpu_custom_call.1} parent=11 // pred_check
          %p290 = pneg %p154
        $region30: #{tpu_custom_call.1} parent=11 // pred_check_branch
          %292 = sbr.rel (%p290) target = $region32
        $region31: #{tpu_custom_call.1} parent=11 // pred_region
          %s294 = ssub.s32 512, 512
          %295 = vsyncadd [#allocation9], %s294
          %s296 = sshll.u32 [#allocation8], 4
          %s297 = int_to_ptr.vmem [resolvable:$true] %s296
          %302 = dma.hbm_to_vmem [thread:$0]  %s5, 512, %s297, [#allocation9], 128, 128, 8
        $region32: #{tpu_custom_call.1} parent=11 // pred_fallthru
          _
        // Predicated region
        $region33: #{tpu_custom_call.1} parent=11 // pred_check
          %p303 = pneg %p175
        $region34: #{tpu_custom_call.1} parent=11 // pred_check_branch
          %305 = sbr.rel (%p303) target = $region36
        $region35: #{tpu_custom_call.1} parent=11 // pred_region
          _
        $region36: #{tpu_custom_call.1} parent=11 // pred_fallthru
          _
        // Predicated region
        $region37: #{tpu_custom_call.1} parent=11 // pred_check
          %p306 = pneg %p196
        $region38: #{tpu_custom_call.1} parent=11 // pred_check_branch
          %308 = sbr.rel (%p306) target = $region40
        $region39: #{tpu_custom_call.1} parent=11 // pred_region
          _
        $region40: #{tpu_custom_call.1} parent=11 // pred_fallthru
          _
        // Predicated region
        $region41: #{tpu_custom_call.1} parent=11 // pred_check
          %p309 = pneg %p217
        $region42: #{tpu_custom_call.1} parent=11 // pred_check_branch
          %311 = sbr.rel (%p309) target = $region44
        $region43: #{tpu_custom_call.1} parent=11 // pred_region
          _
        $region44: #{tpu_custom_call.1} parent=11 // pred_fallthru
          _
      $region12: #{tpu_custom_call.1} parent=5 // pred_fallthru
        _
      %p312 = scmp.lt.s32.totalorder %s23, 2
      // Predicated region
      $region45: #{tpu_custom_call.1} parent=5 // pred_check
        %p313 = pneg %p312
      $region46: #{tpu_custom_call.1} parent=5 // pred_check_branch
        %315 = sbr.rel (%p313) target = $region48
      $region47: #{tpu_custom_call.1} parent=5 // pred_region
        // Predicated region
        $region49: #{tpu_custom_call.1} parent=47 // pred_check
          %p316 = pneg %p43
        $region50: #{tpu_custom_call.1} parent=47 // pred_check_branch
          %318 = sbr.rel (%p316) target = $region52
        $region51: #{tpu_custom_call.1} parent=47 // pred_region
          %s319 = sand.u32 %s33, 1
          %s320 = scalar_lea.sflag [#allocation3], %s319
          %s321 = sand.u32 %s33, 1
          %s322 = smul.addr %s321, 8
          %s323 = scalar_lea.vmem [#allocation2], %s322
          %s325 = ssub.s32 128, 128
          %326 = vsyncadd %s320, %s325
          %s327 = smul.addr %s23, 128
          %s328 = scalar_lea.hbm %s0, %s327
          %s330 = sshll.u32 %s323, 4
          %s331 = int_to_ptr.vmem [resolvable:$true] %s330
          %333 = dma.hbm_to_vmem [thread:$0]  %s328, 128, %s331, %s320
        $region52: #{tpu_custom_call.1} parent=47 // pred_fallthru
          _
      $region48: #{tpu_custom_call.1} parent=5 // pred_fallthru
        _
      %p334 = scmp.le.s32.totalorder 1, %s23
      %p335 = scmp.lt.s32.totalorder %s23, 3
      %p336 = pnand %p334, %p335
      %p337 = pneg %p336
      // Predicated region
      $region53: #{tpu_custom_call.1} parent=5 // pred_check
        _
      $region54: #{tpu_custom_call.1} parent=5 // pred_check_branch
        %339 = sbr.rel (%p336) target = $region56
      $region55: #{tpu_custom_call.1} parent=5 // pred_region
        %s340 = ssub.s32 %s23, 1
        %s341 = sand.u32 %s36, 1
        %s342 = scalar_lea.sflag [#allocation3], %s341
        %s343 = sand.u32 %s36, 1
        %s344 = smul.addr %s343, 8
        %s345 = scalar_lea.vmem [#allocation2], %s344
        // Predicated region
        $region57: #{tpu_custom_call.1} parent=55 // pred_check
          %p346 = pneg %p49
        $region58: #{tpu_custom_call.1} parent=55 // pred_check_branch
          %348 = sbr.rel (%p346) target = $region60
        $region59: #{tpu_custom_call.1} parent=55 // pred_region
          %349 = dma.done %s342, 128
        $region60: #{tpu_custom_call.1} parent=55 // pred_fallthru
          _
        // Predicated region
        $region61: #{tpu_custom_call.1} parent=55 // pred_check
          %p350 = pneg %p70
        $region62: #{tpu_custom_call.1} parent=55 // pred_check_branch
          %352 = sbr.rel (%p350) target = $region64
        $region63: #{tpu_custom_call.1} parent=55 // pred_region
          %353 = dma.done [#allocation6], 256
        $region64: #{tpu_custom_call.1} parent=55 // pred_fallthru
          _
        // Predicated region
        $region65: #{tpu_custom_call.1} parent=55 // pred_check
          %p354 = pneg %p112
        $region66: #{tpu_custom_call.1} parent=55 // pred_check_branch
          %356 = sbr.rel (%p354) target = $region68
        $region67: #{tpu_custom_call.1} parent=55 // pred_region
          %357 = dma.done [#allocation6], 512
        $region68: #{tpu_custom_call.1} parent=55 // pred_fallthru
          _
        // Predicated region
        $region69: #{tpu_custom_call.1} parent=55 // pred_check
          %p358 = pneg %p154
        $region70: #{tpu_custom_call.1} parent=55 // pred_check_branch
          %360 = sbr.rel (%p358) target = $region72
        $region71: #{tpu_custom_call.1} parent=55 // pred_region
          %361 = dma.done [#allocation9], 512
        $region72: #{tpu_custom_call.1} parent=55 // pred_fallthru
          _
        %s362 = sand.u32 %s36, 1
        %s363 = scalar_lea.sflag [#allocation3], %s362
        %s364 = sand.u32 %s36, 1
        %s365 = smul.addr %s364, 8
        %s366 = scalar_lea.vmem [#allocation2], %s365
        %p367 = pneg %p49
        %p368 = pneg %p46
        %p369 = pneg %p70
        %p370 = pneg %p67
        %p371 = pneg %p91
        %p372 = pneg %p88
        %p373 = pneg %p112
        %p374 = pneg %p109
        %p375 = pneg %p133
        %p376 = pneg %p130
        %p377 = pneg %p154
        %p378 = pneg %p151
        %p379 = pneg %p175
        %p380 = pneg %p172
        %p381 = pneg %p196
        %p382 = pneg %p193
        %p383 = pneg %p217
        %p384 = pneg %p214
        %p385 = pneg %p243
        %p386 = pneg %p240
        %s387 = sand.u32 %s230, 1
        %s388 = scalar_lea.sflag [#allocation4], %s387
        %s389 = sand.u32 %s230, 1
        %s390 = smul.addr %s389, 8
        %s391 = scalar_lea.vmem [#allocation10], %s390
        %v392 = vld [vmem:[%s345] sm:$0xff]
        %v393 = vld [vmem:[#allocation5] sm:$0xff]
        %v394 = vld [vmem:[#allocation5 + $0x8] sm:$0xff]
        %v395 = vld [vmem:[%s2] sm:$0x1]
        %v397 = vlaneseq
        %v398 = vshrl.u32 %v397, 7
        %v399 = vsub.s32 0, %v398
        %v400 = vrot.slane %v395, %v399
        %vm402 = vcmask 130048
        %v404 = vsel %vm402, %v392, 0
        %406 = vmatprep.subr.mxu0 0.0
        %407 = vmatpush1.msra.mxu0 0.0
        %408 = vmatprep.subr.mxu0 0.0
        %409 = vmatpush1.msra.mxu0 0.0
        %410 = vmatprep.subr.mxu0 0.0
        %411 = vmatpush1.msra.mxu0 0.0
        %412 = vmatprep.subr.mxu0 0.0
        %413 = vmatpush1.msra.mxu0 0.0
        %414 = vmatprep.subr.mxu0 0.0
        %415 = vmatpush1.msra.mxu0 0.0
        %416 = vmatprep.subr.mxu0 0.0
        %417 = vmatpush1.msra.mxu0 0.0
        %418 = vmatprep.subr.mxu0 0.0
        %419 = vmatpush1.msra.mxu0 0.0
        %420 = vmatprep.subr.mxu0 0.0
        %421 = vmatpush1.msra.mxu0 0.0
        %422 = vmatprep.subr.mxu0 0.0
        %423 = vmatpush1.msra.mxu0 0.0
        %424 = vmatprep.subr.mxu0 0.0
        %425 = vmatpush1.msra.mxu0 0.0
        %426 = vmatprep.subr.mxu0 0.0
        %427 = vmatpush1.msra.mxu0 0.0
        %428 = vmatprep.subr.mxu0 0.0
        %429 = vmatpush1.msra.mxu0 0.0
        %430 = vmatprep.subr.mxu0 0.0
        %431 = vmatpush1.msra.mxu0 0.0
        %432 = vmatprep.subr.mxu0 0.0
        %433 = vmatpush1.msra.mxu0 0.0
        %434 = vmatprep.subr.mxu0 0.0
        %435 = vmatpush1.msra.mxu0 %v394
        %436 = vmatprep.subr.mxu0 0.0
        %437 = vmatpush1.msra.mxu0 %v393
        %438 = vmatprep.subr.mxu0 0.0
        %439 = vmatpush2.msra.mxu0 0.0
        %440 = vmatprep.subr.mxu0 0.0
        %441 = vmatpush2.msra.mxu0 0.0
        %442 = vmatprep.subr.mxu0 0.0
        %443 = vmatpush2.msra.mxu0 0.0
        %444 = vmatprep.subr.mxu0 0.0
        %445 = vmatpush2.msra.mxu0 0.0
        %446 = vmatprep.subr.mxu0 0.0
        %447 = vmatpush2.msra.mxu0 0.0
        %448 = vmatprep.subr.mxu0 0.0
        %449 = vmatpush2.msra.mxu0 0.0
        %450 = vmatprep.subr.mxu0 0.0
        %451 = vmatpush2.msra.mxu0 0.0
        %452 = vmatprep.subr.mxu0 0.0
        %453 = vmatpush2.msra.mxu0 0.0
        %454 = vmatprep.subr.mxu0 0.0
        %455 = vmatpush2.msra.mxu0 0.0
        %456 = vmatprep.subr.mxu0 0.0
        %457 = vmatpush2.msra.mxu0 0.0
        %458 = vmatprep.subr.mxu0 0.0
        %459 = vmatpush2.msra.mxu0 0.0
        %460 = vmatprep.subr.mxu0 0.0
        %461 = vmatpush2.msra.mxu0 0.0
        %462 = vmatprep.subr.mxu0 0.0
        %463 = vmatpush2.msra.mxu0 0.0
        %464 = vmatprep.subr.mxu0 0.0
        %465 = vmatpush2.msra.mxu0 0.0
        %466 = vmatprep.subr.mxu0 0.0
        %467 = vmatpush2.msra.mxu0 0.0
        %468 = vmatprep.subr.mxu0 0.0
        %469 = vmatpush2.msra.mxu0 0.0
        %470 = vmatprep.mubr.f32.mxu0 0.0
        %471 = vmatmul.mubr.f32.gmra.mxu0 %v404
        %v472 = vpop.f32.mrf.mxu0
        %v473 = vadd.f32 %v400, %v472
        %v474 = vpop.f32.mrf.mxu0
        %475 = vdwg.mxu0
        %v476 = vmax.f32 %v473, 0.0
        %v477 = vld [vmem:[#allocation7] sm:$0xff]
        %v478 = vld [vmem:[#allocation7 + $0x8] sm:$0xff]
        %v479 = vld [vmem:[#allocation7 + $0x10] sm:$0xff]
        %v480 = vld [vmem:[#allocation7 + $0x18] sm:$0xff]
        %v481 = vld [vmem:[%s4] sm:$0x1]
        %v483 = vlaneseq
        %v484 = vshrl.u32 %v483, 7
        %v485 = vsub.s32 0, %v484
        %v486 = vrot.slane %v481, %v485
        %vm488 = vcmask 261120
        %v490 = vsel %vm488, %v476, 0
        %492 = vmatprep.subr.mxu0 0.0
        %493 = vmatpush1.msra.mxu0 0.0
        %494 = vmatprep.subr.mxu0 0.0
        %495 = vmatpush1.msra.mxu0 0.0
        %496 = vmatprep.subr.mxu0 0.0
        %497 = vmatpush1.msra.mxu0 0.0
        %498 = vmatprep.subr.mxu0 0.0
        %499 = vmatpush1.msra.mxu0 0.0
        %500 = vmatprep.subr.mxu0 0.0
        %501 = vmatpush1.msra.mxu0 0.0
        %502 = vmatprep.subr.mxu0 0.0
        %503 = vmatpush1.msra.mxu0 0.0
        %504 = vmatprep.subr.mxu0 0.0
        %505 = vmatpush1.msra.mxu0 0.0
        %506 = vmatprep.subr.mxu0 0.0
        %507 = vmatpush1.msra.mxu0 0.0
        %508 = vmatprep.subr.mxu0 0.0
        %509 = vmatpush1.msra.mxu0 0.0
        %510 = vmatprep.subr.mxu0 0.0
        %511 = vmatpush1.msra.mxu0 0.0
        %512 = vmatprep.subr.mxu0 0.0
        %513 = vmatpush1.msra.mxu0 0.0
        %514 = vmatprep.subr.mxu0 0.0
        %515 = vmatpush1.msra.mxu0 0.0
        %516 = vmatprep.subr.mxu0 0.0
        %517 = vmatpush1.msra.mxu0 %v480
        %518 = vmatprep.subr.mxu0 0.0
        %519 = vmatpush1.msra.mxu0 %v479
        %520 = vmatprep.subr.mxu0 0.0
        %521 = vmatpush1.msra.mxu0 %v478
        %522 = vmatprep.subr.mxu0 0.0
        %523 = vmatpush1.msra.mxu0 %v477
        %524 = vmatprep.subr.mxu0 0.0
        %525 = vmatpush2.msra.mxu0 0.0
        %526 = vmatprep.subr.mxu0 0.0
        %527 = vmatpush2.msra.mxu0 0.0
        %528 = vmatprep.subr.mxu0 0.0
        %529 = vmatpush2.msra.mxu0 0.0
        %530 = vmatprep.subr.mxu0 0.0
        %531 = vmatpush2.msra.mxu0 0.0
        %532 = vmatprep.subr.mxu0 0.0
        %533 = vmatpush2.msra.mxu0 0.0
        %534 = vmatprep.subr.mxu0 0.0
        %535 = vmatpush2.msra.mxu0 0.0
        %536 = vmatprep.subr.mxu0 0.0
        %537 = vmatpush2.msra.mxu0 0.0
        %538 = vmatprep.subr.mxu0 0.0
        %539 = vmatpush2.msra.mxu0 0.0
        %540 = vmatprep.subr.mxu0 0.0
        %541 = vmatpush2.msra.mxu0 0.0
        %542 = vmatprep.subr.mxu0 0.0
        %543 = vmatpush2.msra.mxu0 0.0
        %544 = vmatprep.subr.mxu0 0.0
        %545 = vmatpush2.msra.mxu0 0.0
        %546 = vmatprep.subr.mxu0 0.0
        %547 = vmatpush2.msra.mxu0 0.0
        %548 = vmatprep.subr.mxu0 0.0
        %549 = vmatpush2.msra.mxu0 0.0
        %550 = vmatprep.subr.mxu0 0.0
        %551 = vmatpush2.msra.mxu0 0.0
        %552 = vmatprep.subr.mxu0 0.0
        %553 = vmatpush2.msra.mxu0 0.0
        %554 = vmatprep.subr.mxu0 0.0
        %555 = vmatpush2.msra.mxu0 0.0
        %556 = vmatprep.mubr.f32.mxu0 0.0
        %557 = vmatmul.mubr.f32.gmra.mxu0 %v490
        %v558 = vpop.f32.mrf.mxu0
        %v559 = vadd.f32 %v486, %v558
        %v560 = vpop.f32.mrf.mxu0
        %561 = vdwg.mxu0
        %v562 = vmax.f32 %v559, 0.0
        %v563 = vld [vmem:[#allocation8] sm:$0xff]
        %v564 = vld [vmem:[#allocation8 + $0x8] sm:$0xff]
        %v565 = vld [vmem:[#allocation8 + $0x10] sm:$0xff]
        %v566 = vld [vmem:[#allocation8 + $0x18] sm:$0xff]
        %v567 = vld [vmem:[%s6] sm:$0x1]
        %v569 = vlaneseq
        %v570 = vshrl.u32 %v569, 7
        %v571 = vsub.s32 0, %v570
        %v572 = vrot.slane %v567, %v571
        %v575 = vsel %vm488, %v562, 0
        %577 = vmatprep.subr.mxu0 0.0
        %578 = vmatpush1.msra.mxu0 0.0
        %579 = vmatprep.subr.mxu0 0.0
        %580 = vmatpush1.msra.mxu0 0.0
        %581 = vmatprep.subr.mxu0 0.0
        %582 = vmatpush1.msra.mxu0 0.0
        %583 = vmatprep.subr.mxu0 0.0
        %584 = vmatpush1.msra.mxu0 0.0
        %585 = vmatprep.subr.mxu0 0.0
        %586 = vmatpush1.msra.mxu0 0.0
        %587 = vmatprep.subr.mxu0 0.0
        %588 = vmatpush1.msra.mxu0 0.0
        %589 = vmatprep.subr.mxu0 0.0
        %590 = vmatpush1.msra.mxu0 0.0
        %591 = vmatprep.subr.mxu0 0.0
        %592 = vmatpush1.msra.mxu0 0.0
        %593 = vmatprep.subr.mxu0 0.0
        %594 = vmatpush1.msra.mxu0 0.0
        %595 = vmatprep.subr.mxu0 0.0
        %596 = vmatpush1.msra.mxu0 0.0
        %597 = vmatprep.subr.mxu0 0.0
        %598 = vmatpush1.msra.mxu0 0.0
        %599 = vmatprep.subr.mxu0 0.0
        %600 = vmatpush1.msra.mxu0 0.0
        %601 = vmatprep.subr.mxu0 0.0
        %602 = vmatpush1.msra.mxu0 %v566
        %603 = vmatprep.subr.mxu0 0.0
        %604 = vmatpush1.msra.mxu0 %v565
        %605 = vmatprep.subr.mxu0 0.0
        %606 = vmatpush1.msra.mxu0 %v564
        %607 = vmatprep.subr.mxu0 0.0
        %608 = vmatpush1.msra.mxu0 %v563
        %609 = vmatprep.subr.mxu0 0.0
        %610 = vmatpush2.msra.mxu0 0.0
        %611 = vmatprep.subr.mxu0 0.0
        %612 = vmatpush2.msra.mxu0 0.0
        %613 = vmatprep.subr.mxu0 0.0
        %614 = vmatpush2.msra.mxu0 0.0
        %615 = vmatprep.subr.mxu0 0.0
        %616 = vmatpush2.msra.mxu0 0.0
        %617 = vmatprep.subr.mxu0 0.0
        %618 = vmatpush2.msra.mxu0 0.0
        %619 = vmatprep.subr.mxu0 0.0
        %620 = vmatpush2.msra.mxu0 0.0
        %621 = vmatprep.subr.mxu0 0.0
        %622 = vmatpush2.msra.mxu0 0.0
        %623 = vmatprep.subr.mxu0 0.0
        %624 = vmatpush2.msra.mxu0 0.0
        %625 = vmatprep.subr.mxu0 0.0
        %626 = vmatpush2.msra.mxu0 0.0
        %627 = vmatprep.subr.mxu0 0.0
        %628 = vmatpush2.msra.mxu0 0.0
        %629 = vmatprep.subr.mxu0 0.0
        %630 = vmatpush2.msra.mxu0 0.0
        %631 = vmatprep.subr.mxu0 0.0
        %632 = vmatpush2.msra.mxu0 0.0
        %633 = vmatprep.subr.mxu0 0.0
        %634 = vmatpush2.msra.mxu0 0.0
        %635 = vmatprep.subr.mxu0 0.0
        %636 = vmatpush2.msra.mxu0 0.0
        %637 = vmatprep.subr.mxu0 0.0
        %638 = vmatpush2.msra.mxu0 0.0
        %639 = vmatprep.subr.mxu0 0.0
        %640 = vmatpush2.msra.mxu0 0.0
        %641 = vmatprep.mubr.f32.mxu0 0.0
        %642 = vmatmul.mubr.f32.gmra.mxu0 %v575
        %v643 = vpop.f32.mrf.mxu0
        %v644 = vadd.f32 %v572, %v643
        %v645 = vpop.f32.mrf.mxu0
        %646 = vdwg.mxu0
        %v647 = vld [vmem:[%s7] sm:$0x1]
        %v649 = vlaneseq
        %v650 = vshrl.u32 %v649, 7
        %v651 = vsub.s32 0, %v650
        %v652 = vrot.slane %v647, %v651
        %v654 = vmax.f32 %v644, %v652
        %v655 = vld [vmem:[%s8] sm:$0x1]
        %v657 = vlaneseq
        %v658 = vshrl.u32 %v657, 7
        %v659 = vsub.s32 0, %v658
        %v660 = vrot.slane %v655, %v659
        %v662 = vmin.f32 %v654, %v660
        %663 = vst [vmem:[%s391] sm:$0xff] %v662
        %s664 = sand.u32 %s230, 1
        %s665 = scalar_lea.sflag [#allocation4], %s664
        %s666 = sand.u32 %s230, 1
        %s667 = smul.addr %s666, 8
        %s668 = scalar_lea.vmem [#allocation10], %s667
        // Predicated region
        $region73: #{tpu_custom_call.1} parent=55 // pred_check
          %p669 = pneg %p240
        $region74: #{tpu_custom_call.1} parent=55 // pred_check_branch
          %671 = sbr.rel (%p669) target = $region76
        $region75: #{tpu_custom_call.1} parent=55 // pred_region
          %s673 = ssub.s32 128, 128
          %674 = vsyncadd %s665, %s673
          %s675 = smul.addr %s28, 128
          %s676 = scalar_lea.hbm %s9, %s675
          %s678 = sshll.u32 %s668, 4
          %s679 = int_to_ptr.vmem [resolvable:$true] %s678
          %681 = dma.vmem_to_hbm [thread:$0]  %s679, 128, %s676, %s665
        $region76: #{tpu_custom_call.1} parent=55 // pred_fallthru
          _
      $region56: #{tpu_custom_call.1} parent=5 // pred_fallthru
        _
      %p682 = scmp.le.s32.totalorder 2, %s23
      // Predicated region
      $region77: #{tpu_custom_call.1} parent=5 // pred_check
        %p683 = pneg %p682
      $region78: #{tpu_custom_call.1} parent=5 // pred_check_branch
        %685 = sbr.rel (%p683) target = $region80
      $region79: #{tpu_custom_call.1} parent=5 // pred_region
        %s686 = ssub.s32 %s23, 2
        // Predicated region
        $region81: #{tpu_custom_call.1} parent=79 // pred_check
          %p687 = pneg %p246
        $region82: #{tpu_custom_call.1} parent=79 // pred_check_branch
          %689 = sbr.rel (%p687) target = $region84
        $region83: #{tpu_custom_call.1} parent=79 // pred_region
          %s690 = sand.u32 %s231, 1
          %s691 = scalar_lea.sflag [#allocation4], %s690
          %s692 = sand.u32 %s231, 1
          %s693 = smul.addr %s692, 8
          %s694 = scalar_lea.vmem [#allocation10], %s693
          %695 = dma.done %s691, 128
        $region84: #{tpu_custom_call.1} parent=79 // pred_fallthru
          _
      $region80: #{tpu_custom_call.1} parent=5 // pred_fallthru
        _
    $region6: #{tpu_custom_call.1} parent=1 // loop_footer
      %s27 = sadd.s32 1, %s23
    $region7: #{tpu_custom_call.1} parent=1 // loop_footer_branch
      %22 = sbr.rel target = $region3
    $region8: #{tpu_custom_call.1} parent=1 // loop_exit
      _
    %696 = vsyncpa [#allocation3], 1
    %s697 = scalar_lea.sflag [#allocation3], 1
    %698 = vsyncpa %s697, 1
    %699 = vsyncpa [#allocation6], 1
    %700 = vsyncpa [#allocation9], 1
    %701 = vsyncpa [#allocation4], 1
    %s702 = scalar_lea.sflag [#allocation4], 1
    %703 = vsyncpa %s702, 1

</llo_original>
